<compile_context>
chip_gen: v5e
topology: v5e:2x2
jax: 0.10.0
libtpu: 0.0.40
codegen_flags: <defaults>
</compile_context>

<pallas_src>
import jax
import jax.numpy as jnp
from jax import lax
from jax.experimental import pallas as pl
from jax.experimental.pallas import tpu as pltpu

_EPS = 1e-5
_BF16 = jnp.bfloat16


def _linear_bn(x, w, g, be, *, relu):
    """x @ w -> training-mode BatchNorm1d (folded affine) -> optional ReLU.

    Linear bias intentionally omitted (cancels under batch-mean subtraction).
    BN stats in one pass; affine folded to a single per-feature scale/shift.
    """
    y = jnp.dot(x, w, preferred_element_type=jnp.float32)    # MXU, f32 acc
    mu = jnp.mean(y, axis=0, keepdims=True)                   # (1, F)
    m2 = jnp.mean(y * y, axis=0, keepdims=True)                # (1, F)
    var = jnp.maximum(m2 - mu * mu, 0.0)                      # biased variance
    scale = g * lax.rsqrt(var + _EPS)                         # EUP rsqrt, (1, F)
    shift = be - mu * scale                                   # (1, F)
    y = y * scale + shift                                     # 1 mul + 1 add on (N, F)
    if relu:
        y = jnp.maximum(y, 0.0)
    return y


def _fused_kernel(x_ref, w1_ref, g1_ref, be1_ref,
                  w2_ref, g2_ref, be2_ref,
                  w3_ref, g3_ref, be3_ref, o_ref):
    # All operands are whole-array VMEM blocks; intermediates stay in VMEM.
    h = _linear_bn(x_ref[...], w1_ref[...], g1_ref[...], be1_ref[...], relu=True)
    h = _linear_bn(h.astype(_BF16), w2_ref[...], g2_ref[...], be2_ref[...], relu=True)
    y = _linear_bn(h.astype(_BF16), w3_ref[...], g3_ref[...], be3_ref[...], relu=False)
    # Exact sigmoid; exp goes to the EUP, divide is on a tiny (N, out) tensor.
    o_ref[...] = (1.0 / (1.0 + jnp.exp(-y))).astype(o_ref.dtype)


def _round_up(v, m):
    return (v + m - 1) // m * m


def _pad_cols(a, to):
    pad = to - a.shape[1]
    return a if pad == 0 else jnp.pad(a, ((0, 0), (0, pad)))


def _pad_rows(a, to):
    pad = to - a.shape[0]
    return a if pad == 0 else jnp.pad(a, ((0, pad), (0, 0)))


def projection_mlp(x, params):
    """Forward pass of projection_MLP (num_layers=3, training-mode BN + sigmoid)."""
    n, in_dim = x.shape
    # bf16 activations pack 16 rows per sublane tile.
    assert n % 16 == 0, "batch must be a multiple of 16 (bf16 sublane packing)"
    # TODO(synk): other batch sizes need row-masked BN statistics (pad + mask).

    hidden = params["w1"].shape[1]
    out_dim = params["w3"].shape[1]
    # Lane-dense feature dims (multiples of 128 -> unmasked stores).  SimSiam's
    # default dims (1024/2048/256) are already 256-aligned for full MXU passes.
    f1 = _round_up(hidden, 128)
    f3 = _round_up(out_dim, 128)

    # Zero-pad feature axes; cast MXU operands to bf16 once here.  Padded
    # hidden columns stay exactly zero: zero w1 columns -> mu = var = 0 and
    # scale = gamma * rsqrt(eps) = 0 because gamma is ZERO-padded (keep this
    # invariant); the matching w2/w3 rows are zero anyway.
    w1 = _pad_cols(params["w1"], f1).astype(_BF16)
    w2 = _pad_cols(_pad_rows(params["w2"], f1), f1).astype(_BF16)
    w3 = _pad_cols(_pad_rows(params["w3"], f1), f3).astype(_BF16)
    g1, be1 = _pad_cols(params["g1"], f1), _pad_cols(params["be1"], f1)
    g2, be2 = _pad_cols(params["g2"], f1), _pad_cols(params["be2"], f1)
    g3, be3 = _pad_cols(params["g3"], f3), _pad_cols(params["be3"], f3)
    xb = x.astype(_BF16)

    # Advisory cost estimate so XLA can overlap surrounding ops.
    flops = 2 * n * (in_dim * f1 + f1 * f1 + f1 * f3)
    transcendentals = n * f3                                  # exp in sigmoid
    in_bytes = ((xb.size + w1.size + w2.size + w3.size) * 2
                + (g1.size + be1.size + g2.size + be2.size
                   + g3.size + be3.size) * 4)
    out_bytes = n * f3 * 4
    cost = pl.CostEstimate(flops=int(flops),
                           transcendentals=int(transcendentals),
                           bytes_accessed=int(in_bytes + out_bytes))

    # VMEM budget: resident operands + output + ~3 live (N, f1) f32
    # intermediates, with 2x slack; capped at 48 MiB (v7x-safe headroom).
    live = in_bytes + out_bytes + 3 * n * f1 * 4
    vmem_limit = int(min(max(2 * live, 32 * 1024 * 1024), 48 * 1024 * 1024))

    out = pl.pallas_call(
        _fused_kernel,
        out_shape=jax.ShapeDtypeStruct((n, f3), jnp.float32),
        compiler_params=pltpu.CompilerParams(vmem_limit_bytes=vmem_limit),
        cost_estimate=cost,
    )(xb, w1, g1, be1, w2, g2, be2, w3, g3, be3)
    return out[:, :out_dim]


def init_params(key, in_dim, hidden_dim, out_dim):
    k1, k2, k3 = jax.random.split(key, 3)

    def linear(k, fan_in, fan_out):
        bound = 1.0 / jnp.sqrt(fan_in)
        kw, kb = jax.random.split(k)
        w = jax.random.uniform(kw, (fan_in, fan_out), jnp.float32, -bound, bound)
        b = jax.random.uniform(kb, (1, fan_out), jnp.float32, -bound, bound)
        return w, b

    w1, b1 = linear(k1, in_dim, hidden_dim)
    w2, b2 = linear(k2, hidden_dim, hidden_dim)
    w3, b3 = linear(k3, hidden_dim, out_dim)
    return dict(
        w1=w1, b1=b1, g1=jnp.ones((1, hidden_dim), jnp.float32),
        be1=jnp.zeros((1, hidden_dim), jnp.float32),
        w2=w2, b2=b2, g2=jnp.ones((1, hidden_dim), jnp.float32),
        be2=jnp.zeros((1, hidden_dim), jnp.float32),
        w3=w3, b3=b3, g3=jnp.ones((1, out_dim), jnp.float32),
        be3=jnp.zeros((1, out_dim), jnp.float32),
    )


def _reference_f32(x, p):
    """Faithful f32 PyTorch semantics (Linear bias included, unfused BN)."""
    def lbn(h, w, b, g, be, relu):
        y = h @ w + b
        mu = y.mean(0, keepdims=True)
        var = ((y - mu) ** 2).mean(0, keepdims=True)
        y = (y - mu) / jnp.sqrt(var + _EPS) * g + be
        return jnp.maximum(y, 0.0) if relu else y

    h = lbn(x, p["w1"], p["b1"], p["g1"], p["be1"], True)
    h = lbn(h, p["w2"], p["b2"], p["g2"], p["be2"], True)
    h = lbn(h, p["w3"], p["b3"], p["g3"], p["be3"], False)
    return jax.nn.sigmoid(h)


def _reference_mirrored(x, p):
    """Mirrors the kernel numerics: bf16 matmul operands (f32 acc), bias
    dropped, one-pass variance, folded BN affine, bf16 inter-layer
    activations, exact sigmoid."""
    def lbn(h, w, g, be, relu):
        y = jnp.dot(h.astype(_BF16), w.astype(_BF16),
                    preferred_element_type=jnp.float32)
        mu = y.mean(0, keepdims=True)
        var = jnp.maximum((y * y).mean(0, keepdims=True) - mu * mu, 0.0)
        scale = g * lax.rsqrt(var + _EPS)
        y = y * scale + (be - mu * scale)
        return jnp.maximum(y, 0.0) if relu else y

    h = lbn(x, p["w1"], p["g1"], p["be1"], True).astype(_BF16)
    h = lbn(h, p["w2"], p["g2"], p["be2"], True).astype(_BF16)
    h = lbn(h, p["w3"], p["g3"], p["be3"], False)
    return jax.nn.sigmoid(h)


if __name__ == "__main__":
    # Small shapes consistent with the module: batch=16 (multiple of 16 for
    # bf16 packing), in_dim=32, hidden_dim=128, out_dim=64 (defaults 1024/256
    # scaled down).
    batch, in_dim, hidden_dim, out_dim = 16, 32, 128, 64

    key = jax.random.PRNGKey(0)
    kx, kp = jax.random.split(key)
    x = jax.random.normal(kx, (batch, in_dim), jnp.float32)
    params = init_params(kp, in_dim, hidden_dim, out_dim)

    out = jax.block_until_ready(projection_mlp(x, params))
    assert out.shape == (batch, out_dim)
    assert bool(jnp.all(jnp.isfinite(out)))

    # 1) Tight check against a reference that mirrors the kernel numerics.
    ref_m = _reference_mirrored(x, params)
    err_m = float(jnp.abs(out - ref_m).max())
    assert err_m < 1e-2, f"mirrored-reference mismatch: {err_m}"

    # 2) Looser check against faithful f32 PyTorch semantics (slack covers the
    #    bf16 matmul operands / inter-layer activations; bias-drop and BN-fold
    #    are exact in real arithmetic).
    ref_f = _reference_f32(x, params)
    err_f = float(jnp.abs(out - ref_f).max())
    assert err_f < 5e-2, f"f32-reference mismatch: {err_f}"

    print("KERNEL_OK")
</pallas_src>

<mosaic_0001>
module attributes {stable_mosaic.version = 11 : i64} {
  func.func @_fused_kernel(%arg0: memref<16x32xbf16, #tpu.memory_space<vmem>>, %arg1: memref<32x128xbf16, #tpu.memory_space<vmem>>, %arg2: memref<1x128xf32, #tpu.memory_space<vmem>>, %arg3: memref<1x128xf32, #tpu.memory_space<vmem>>, %arg4: memref<128x128xbf16, #tpu.memory_space<vmem>>, %arg5: memref<1x128xf32, #tpu.memory_space<vmem>>, %arg6: memref<1x128xf32, #tpu.memory_space<vmem>>, %arg7: memref<128x128xbf16, #tpu.memory_space<vmem>>, %arg8: memref<1x128xf32, #tpu.memory_space<vmem>>, %arg9: memref<1x128xf32, #tpu.memory_space<vmem>>, %arg10: memref<16x128xf32, #tpu.memory_space<vmem>>) attributes {dimension_semantics = [], scalar_prefetch = 0 : i64, scratch_operands = 0 : i64, tpu.core_type = #tpu.core_type<tc>} {
    %c0 = arith.constant 0 : index
    %c0_0 = arith.constant 0 : index
    %0 = vector.load %arg0[%c0, %c0_0] : memref<16x32xbf16, #tpu.memory_space<vmem>>, vector<16x32xbf16>
    %c0_1 = arith.constant 0 : index
    %c0_2 = arith.constant 0 : index
    %1 = vector.load %arg1[%c0_1, %c0_2] : memref<32x128xbf16, #tpu.memory_space<vmem>>, vector<32x128xbf16>
    %c0_3 = arith.constant 0 : index
    %c0_4 = arith.constant 0 : index
    %2 = vector.load %arg2[%c0_3, %c0_4] : memref<1x128xf32, #tpu.memory_space<vmem>>, vector<1x128xf32>
    %c0_5 = arith.constant 0 : index
    %c0_6 = arith.constant 0 : index
    %3 = vector.load %arg3[%c0_5, %c0_6] : memref<1x128xf32, #tpu.memory_space<vmem>>, vector<1x128xf32>
    %cst = arith.constant dense<0.000000e+00> : vector<16x128xf32>
    %4 = tpu.matmul %0, %1, %cst {dimension_numbers = #tpu.dot_dimension_numbers<[1], [0], [0], [1], [0, 0, 1, 1], [], []>} : vector<16x32xbf16>, vector<32x128xbf16>, vector<16x128xf32> -> vector<16x128xf32>
    %cst_7 = arith.constant dense<0.000000e+00> : vector<128xf32>
    %5 = vector.multi_reduction <add>, %4, %cst_7 [0] : vector<16x128xf32> to vector<128xf32>
    %6 = vector.shape_cast %5 : vector<128xf32> to vector<1x128xf32>
    %cst_8 = arith.constant 1.600000e+01 : f32
    %7 = vector.broadcast %cst_8 : f32 to vector<1x128xf32>
    %8 = arith.divf %6, %7 : vector<1x128xf32>
    %9 = arith.mulf %4, %4 : vector<16x128xf32>
    %cst_9 = arith.constant dense<0.000000e+00> : vector<128xf32>
    %10 = vector.multi_reduction <add>, %9, %cst_9 [0] : vector<16x128xf32> to vector<128xf32>
    %11 = vector.shape_cast %10 : vector<128xf32> to vector<1x128xf32>
    %cst_10 = arith.constant 1.600000e+01 : f32
    %12 = vector.broadcast %cst_10 : f32 to vector<1x128xf32>
    %13 = arith.divf %11, %12 : vector<1x128xf32>
    %14 = arith.mulf %8, %8 : vector<1x128xf32>
    %15 = arith.subf %13, %14 : vector<1x128xf32>
    %cst_11 = arith.constant 0.000000e+00 : f32
    %16 = vector.broadcast %cst_11 : f32 to vector<1x128xf32>
    %17 = arith.maximumf %15, %16 : vector<1x128xf32>
    %cst_12 = arith.constant 9.99999974E-6 : f32
    %18 = vector.broadcast %cst_12 : f32 to vector<1x128xf32>
    %19 = arith.addf %17, %18 : vector<1x128xf32>
    %20 = math.rsqrt %19 : vector<1x128xf32>
    %21 = arith.mulf %2, %20 : vector<1x128xf32>
    %22 = arith.mulf %8, %21 : vector<1x128xf32>
    %23 = arith.subf %3, %22 : vector<1x128xf32>
    %24 = vector.broadcast %21 : vector<1x128xf32> to vector<16x128xf32>
    %25 = arith.mulf %4, %24 : vector<16x128xf32>
    %26 = vector.broadcast %23 : vector<1x128xf32> to vector<16x128xf32>
    %27 = arith.addf %25, %26 : vector<16x128xf32>
    %cst_13 = arith.constant 0.000000e+00 : f32
    %28 = vector.broadcast %cst_13 : f32 to vector<16x128xf32>
    %29 = arith.maximumf %27, %28 : vector<16x128xf32>
    %30 = arith.truncf %29 : vector<16x128xf32> to vector<16x128xbf16>
    %c0_14 = arith.constant 0 : index
    %c0_15 = arith.constant 0 : index
    %31 = vector.load %arg4[%c0_14, %c0_15] : memref<128x128xbf16, #tpu.memory_space<vmem>>, vector<128x128xbf16>
    %c0_16 = arith.constant 0 : index
    %c0_17 = arith.constant 0 : index
    %32 = vector.load %arg5[%c0_16, %c0_17] : memref<1x128xf32, #tpu.memory_space<vmem>>, vector<1x128xf32>
    %c0_18 = arith.constant 0 : index
    %c0_19 = arith.constant 0 : index
    %33 = vector.load %arg6[%c0_18, %c0_19] : memref<1x128xf32, #tpu.memory_space<vmem>>, vector<1x128xf32>
    %cst_20 = arith.constant dense<0.000000e+00> : vector<16x128xf32>
    %34 = tpu.matmul %30, %31, %cst_20 {dimension_numbers = #tpu.dot_dimension_numbers<[1], [0], [0], [1], [0, 0, 1, 1], [], []>} : vector<16x128xbf16>, vector<128x128xbf16>, vector<16x128xf32> -> vector<16x128xf32>
    %cst_21 = arith.constant dense<0.000000e+00> : vector<128xf32>
    %35 = vector.multi_reduction <add>, %34, %cst_21 [0] : vector<16x128xf32> to vector<128xf32>
    %36 = vector.shape_cast %35 : vector<128xf32> to vector<1x128xf32>
    %cst_22 = arith.constant 1.600000e+01 : f32
    %37 = vector.broadcast %cst_22 : f32 to vector<1x128xf32>
    %38 = arith.divf %36, %37 : vector<1x128xf32>
    %39 = arith.mulf %34, %34 : vector<16x128xf32>
    %cst_23 = arith.constant dense<0.000000e+00> : vector<128xf32>
    %40 = vector.multi_reduction <add>, %39, %cst_23 [0] : vector<16x128xf32> to vector<128xf32>
    %41 = vector.shape_cast %40 : vector<128xf32> to vector<1x128xf32>
    %cst_24 = arith.constant 1.600000e+01 : f32
    %42 = vector.broadcast %cst_24 : f32 to vector<1x128xf32>
    %43 = arith.divf %41, %42 : vector<1x128xf32>
    %44 = arith.mulf %38, %38 : vector<1x128xf32>
    %45 = arith.subf %43, %44 : vector<1x128xf32>
    %cst_25 = arith.constant 0.000000e+00 : f32
    %46 = vector.broadcast %cst_25 : f32 to vector<1x128xf32>
    %47 = arith.maximumf %45, %46 : vector<1x128xf32>
    %cst_26 = arith.constant 9.99999974E-6 : f32
    %48 = vector.broadcast %cst_26 : f32 to vector<1x128xf32>
    %49 = arith.addf %47, %48 : vector<1x128xf32>
    %50 = math.rsqrt %49 : vector<1x128xf32>
    %51 = arith.mulf %32, %50 : vector<1x128xf32>
    %52 = arith.mulf %38, %51 : vector<1x128xf32>
    %53 = arith.subf %33, %52 : vector<1x128xf32>
    %54 = vector.broadcast %51 : vector<1x128xf32> to vector<16x128xf32>
    %55 = arith.mulf %34, %54 : vector<16x128xf32>
    %56 = vector.broadcast %53 : vector<1x128xf32> to vector<16x128xf32>
    %57 = arith.addf %55, %56 : vector<16x128xf32>
    %cst_27 = arith.constant 0.000000e+00 : f32
    %58 = vector.broadcast %cst_27 : f32 to vector<16x128xf32>
    %59 = arith.maximumf %57, %58 : vector<16x128xf32>
    %60 = arith.truncf %59 : vector<16x128xf32> to vector<16x128xbf16>
    %c0_28 = arith.constant 0 : index
    %c0_29 = arith.constant 0 : index
    %61 = vector.load %arg7[%c0_28, %c0_29] : memref<128x128xbf16, #tpu.memory_space<vmem>>, vector<128x128xbf16>
    %c0_30 = arith.constant 0 : index
    %c0_31 = arith.constant 0 : index
    %62 = vector.load %arg8[%c0_30, %c0_31] : memref<1x128xf32, #tpu.memory_space<vmem>>, vector<1x128xf32>
    %c0_32 = arith.constant 0 : index
    %c0_33 = arith.constant 0 : index
    %63 = vector.load %arg9[%c0_32, %c0_33] : memref<1x128xf32, #tpu.memory_space<vmem>>, vector<1x128xf32>
    %cst_34 = arith.constant dense<0.000000e+00> : vector<16x128xf32>
    %64 = tpu.matmul %60, %61, %cst_34 {dimension_numbers = #tpu.dot_dimension_numbers<[1], [0], [0], [1], [0, 0, 1, 1], [], []>} : vector<16x128xbf16>, vector<128x128xbf16>, vector<16x128xf32> -> vector<16x128xf32>
    %cst_35 = arith.constant dense<0.000000e+00> : vector<128xf32>
    %65 = vector.multi_reduction <add>, %64, %cst_35 [0] : vector<16x128xf32> to vector<128xf32>
    %66 = vector.shape_cast %65 : vector<128xf32> to vector<1x128xf32>
    %cst_36 = arith.constant 1.600000e+01 : f32
    %67 = vector.broadcast %cst_36 : f32 to vector<1x128xf32>
    %68 = arith.divf %66, %67 : vector<1x128xf32>
    %69 = arith.mulf %64, %64 : vector<16x128xf32>
    %cst_37 = arith.constant dense<0.000000e+00> : vector<128xf32>
    %70 = vector.multi_reduction <add>, %69, %cst_37 [0] : vector<16x128xf32> to vector<128xf32>
    %71 = vector.shape_cast %70 : vector<128xf32> to vector<1x128xf32>
    %cst_38 = arith.constant 1.600000e+01 : f32
    %72 = vector.broadcast %cst_38 : f32 to vector<1x128xf32>
    %73 = arith.divf %71, %72 : vector<1x128xf32>
    %74 = arith.mulf %68, %68 : vector<1x128xf32>
    %75 = arith.subf %73, %74 : vector<1x128xf32>
    %cst_39 = arith.constant 0.000000e+00 : f32
    %76 = vector.broadcast %cst_39 : f32 to vector<1x128xf32>
    %77 = arith.maximumf %75, %76 : vector<1x128xf32>
    %cst_40 = arith.constant 9.99999974E-6 : f32
    %78 = vector.broadcast %cst_40 : f32 to vector<1x128xf32>
    %79 = arith.addf %77, %78 : vector<1x128xf32>
    %80 = math.rsqrt %79 : vector<1x128xf32>
    %81 = arith.mulf %62, %80 : vector<1x128xf32>
    %82 = arith.mulf %68, %81 : vector<1x128xf32>
    %83 = arith.subf %63, %82 : vector<1x128xf32>
    %84 = vector.broadcast %81 : vector<1x128xf32> to vector<16x128xf32>
    %85 = arith.mulf %64, %84 : vector<16x128xf32>
    %86 = vector.broadcast %83 : vector<1x128xf32> to vector<16x128xf32>
    %87 = arith.addf %85, %86 : vector<16x128xf32>
    %cst_41 = arith.constant 0.000000e+00 : f32
    %88 = vector.broadcast %cst_41 : f32 to vector<16x128xf32>
    %89 = arith.subf %88, %87 : vector<16x128xf32>
    %90 = math.exp %89 : vector<16x128xf32>
    %cst_42 = arith.constant 1.000000e+00 : f32
    %91 = vector.broadcast %cst_42 : f32 to vector<16x128xf32>
    %92 = arith.addf %91, %90 : vector<16x128xf32>
    %cst_43 = arith.constant 1.000000e+00 : f32
    %93 = vector.broadcast %cst_43 : f32 to vector<16x128xf32>
    %94 = arith.divf %93, %92 : vector<16x128xf32>
    %c0_44 = arith.constant 0 : index
    %c0_45 = arith.constant 0 : index
    %95 = vector.load %arg10[%c0_44, %c0_45] : memref<16x128xf32, #tpu.memory_space<vmem>>, vector<16x128xf32>
    tpu.vector_store %arg10[%c0_44, %c0_45], %94 {strides = array<i32>} : memref<16x128xf32, #tpu.memory_space<vmem>>, vector<16x128xf32>,
    return
  }
}

</mosaic_0001>

<llo_original>
// kernel: tpu_custom_call.1
$region0: #{tpu_custom_call.1}
  #allocation0 [shape = 'u32[]', space=smem, size = 0x4, offset = 0x4, fixed_abs, tag = 'smem constant byte address 0x4 - core index']
  #allocation1 [shape = 'u32[72,128]{1,0:T(1,128)}', space=vmem, size = 0x9000, scoped, tag = 'internal scratch']
  %s0 = inlined_call_operand.hbm [shape: bf16[16,32], index: 0, kind: input, shape index: {}]
  %s1 = inlined_call_operand.hbm [shape: bf16[32,128], index: 1, kind: input, shape index: {}]
  %s2 = inlined_call_operand.vmem [shape: f32[1,128], index: 2, kind: input, shape index: {}]
  %s3 = inlined_call_operand.vmem [shape: f32[1,128], index: 3, kind: input, shape index: {}]
  %s4 = inlined_call_operand.hbm [shape: bf16[128,128], index: 4, kind: input, shape index: {}]
  %s5 = inlined_call_operand.vmem [shape: f32[1,128], index: 5, kind: input, shape index: {}]
  %s6 = inlined_call_operand.vmem [shape: f32[1,128], index: 6, kind: input, shape index: {}]
  %s7 = inlined_call_operand.hbm [shape: bf16[128,128], index: 7, kind: input, shape index: {}]
  %s8 = inlined_call_operand.vmem [shape: f32[1,128], index: 8, kind: input, shape index: {}]
  %s9 = inlined_call_operand.vmem [shape: f32[1,128], index: 9, kind: input, shape index: {}]
  %s10 = inlined_call_operand.hbm [shape: f32[16,128], index: 10, kind: output, shape index: {}]
  %s11 = sld [smem:[#allocation0]]
  $region66: #{tpu_custom_call.1} parent=0
    _
  %s13 = ssub.s32 1, %s11
  %s14 = scalar_select 0, %s13, %s11
  $region1: #{tpu_custom_call.1} parent=0
    #allocation2 [shape = 'u8[4096]{0}', space=vmem, size = 0x1000, scoped, tag = 'input window, operand 0, single buffered']
    #allocation3 [shape = 's32[1]{0}', space=sflag, size = 0x4, scoped, tag = 'scoped memory for tpu_custom_call.1']
    #allocation4 [shape = 's32[1]{0}', space=sflag, size = 0x4, scoped, tag = 'scoped memory for tpu_custom_call.1']
    #allocation5 [shape = 'u8[8192]{0}', space=vmem, size = 0x2000, scoped, tag = 'input window, operand 1, single buffered']
    #allocation6 [shape = 's32[1]{0}', space=sflag, size = 0x4, scoped, tag = 'scoped memory for tpu_custom_call.1']
    #allocation7 [shape = 'u8[32768]{0}', space=vmem, size = 0x8000, scoped, tag = 'input window, operand 4, single buffered']
    #allocation8 [shape = 'u8[32768]{0}', space=vmem, size = 0x8000, scoped, tag = 'input window, operand 7, single buffered']
    #allocation9 [shape = 's32[1]{0}', space=sflag, size = 0x4, scoped, tag = 'scoped memory for tpu_custom_call.1']
    #allocation10 [shape = 'u8[8192]{0}', space=vmem, size = 0x2000, scoped, tag = 'output window, operand 0, single buffered']
    %15 = vsyncpa [#allocation3], 0
    %16 = vsyncpa [#allocation6], 0
    %17 = vsyncpa [#allocation9], 0
    %18 = vsyncpa [#allocation4], 0
    // Predicated region
    $region2: #{tpu_custom_call.1} parent=1 // pred_check
      _
    $region3: #{tpu_custom_call.1} parent=1 // pred_check_branch
      %20 = sbr.rel (0) target = $region5
    $region4: #{tpu_custom_call.1} parent=1 // pred_region
      %22 = vsyncadd [#allocation3], 0
      %s23 = sshll.u32 %s0, 4
      %s24 = int_to_ptr.hbm [resolvable:$true] %s23
      %s25 = sshll.u32 [#allocation2], 4
      %s26 = int_to_ptr.vmem [resolvable:$true] %s25
      %31 = dma.hbm_to_vmem [thread:$0]  %s24, 128, %s26, [#allocation3], 64, 64, 4
    $region5: #{tpu_custom_call.1} parent=1 // pred_fallthru
      _
    // Predicated region
    $region6: #{tpu_custom_call.1} parent=1 // pred_check
      _
    $region7: #{tpu_custom_call.1} parent=1 // pred_check_branch
      %33 = sbr.rel (0) target = $region9
    $region8: #{tpu_custom_call.1} parent=1 // pred_region
      %35 = vsyncadd [#allocation6], 0
      %s36 = sshll.u32 %s1, 4
      %s37 = int_to_ptr.hbm [resolvable:$true] %s36
      %s38 = sshll.u32 [#allocation5], 4
      %s39 = int_to_ptr.vmem [resolvable:$true] %s38
      %44 = dma.hbm_to_vmem [thread:$0]  %s37, 256, %s39, [#allocation6], 64, 64, 4
    $region9: #{tpu_custom_call.1} parent=1 // pred_fallthru
      _
    // Predicated region
    $region10: #{tpu_custom_call.1} parent=1 // pred_check
      _
    $region11: #{tpu_custom_call.1} parent=1 // pred_check_branch
      %46 = sbr.rel (0) target = $region13
    $region12: #{tpu_custom_call.1} parent=1 // pred_region
      _
    $region13: #{tpu_custom_call.1} parent=1 // pred_fallthru
      _
    // Predicated region
    $region14: #{tpu_custom_call.1} parent=1 // pred_check
      _
    $region15: #{tpu_custom_call.1} parent=1 // pred_check_branch
      %48 = sbr.rel (0) target = $region17
    $region16: #{tpu_custom_call.1} parent=1 // pred_region
      _
    $region17: #{tpu_custom_call.1} parent=1 // pred_fallthru
      _
    // Predicated region
    $region18: #{tpu_custom_call.1} parent=1 // pred_check
      _
    $region19: #{tpu_custom_call.1} parent=1 // pred_check_branch
      %50 = sbr.rel (0) target = $region21
    $region20: #{tpu_custom_call.1} parent=1 // pred_region
      %52 = vsyncadd [#allocation6], 0
      %s53 = sshll.u32 %s4, 4
      %s54 = int_to_ptr.hbm [resolvable:$true] %s53
      %s55 = sshll.u32 [#allocation7], 4
      %s56 = int_to_ptr.vmem [resolvable:$true] %s55
      %61 = dma.hbm_to_vmem [thread:$0]  %s54, 1024, %s56, [#allocation6], 64, 64, 4
    $region21: #{tpu_custom_call.1} parent=1 // pred_fallthru
      _
    // Predicated region
    $region22: #{tpu_custom_call.1} parent=1 // pred_check
      _
    $region23: #{tpu_custom_call.1} parent=1 // pred_check_branch
      %63 = sbr.rel (0) target = $region25
    $region24: #{tpu_custom_call.1} parent=1 // pred_region
      _
    $region25: #{tpu_custom_call.1} parent=1 // pred_fallthru
      _
    // Predicated region
    $region26: #{tpu_custom_call.1} parent=1 // pred_check
      _
    $region27: #{tpu_custom_call.1} parent=1 // pred_check_branch
      %65 = sbr.rel (0) target = $region29
    $region28: #{tpu_custom_call.1} parent=1 // pred_region
      _
    $region29: #{tpu_custom_call.1} parent=1 // pred_fallthru
      _
    // Predicated region
    $region30: #{tpu_custom_call.1} parent=1 // pred_check
      _
    $region31: #{tpu_custom_call.1} parent=1 // pred_check_branch
      %67 = sbr.rel (0) target = $region33
    $region32: #{tpu_custom_call.1} parent=1 // pred_region
      %69 = vsyncadd [#allocation9], 0
      %s70 = sshll.u32 %s7, 4
      %s71 = int_to_ptr.hbm [resolvable:$true] %s70
      %s72 = sshll.u32 [#allocation8], 4
      %s73 = int_to_ptr.vmem [resolvable:$true] %s72
      %78 = dma.hbm_to_vmem [thread:$0]  %s71, 1024, %s73, [#allocation9], 64, 64, 4
    $region33: #{tpu_custom_call.1} parent=1 // pred_fallthru
      _
    // Predicated region
    $region34: #{tpu_custom_call.1} parent=1 // pred_check
      _
    $region35: #{tpu_custom_call.1} parent=1 // pred_check_branch
      %80 = sbr.rel (0) target = $region37
    $region36: #{tpu_custom_call.1} parent=1 // pred_region
      _
    $region37: #{tpu_custom_call.1} parent=1 // pred_fallthru
      _
    // Predicated region
    $region38: #{tpu_custom_call.1} parent=1 // pred_check
      _
    $region39: #{tpu_custom_call.1} parent=1 // pred_check_branch
      %82 = sbr.rel (0) target = $region41
    $region40: #{tpu_custom_call.1} parent=1 // pred_region
      _
    $region41: #{tpu_custom_call.1} parent=1 // pred_fallthru
      _
    // Predicated region
    $region42: #{tpu_custom_call.1} parent=1 // pred_check
      _
    $region43: #{tpu_custom_call.1} parent=1 // pred_check_branch
      %84 = sbr.rel (0) target = $region45
    $region44: #{tpu_custom_call.1} parent=1 // pred_region
      %86 = dma.done [#allocation3], 128
    $region45: #{tpu_custom_call.1} parent=1 // pred_fallthru
      _
    // Predicated region
    $region46: #{tpu_custom_call.1} parent=1 // pred_check
      _
    $region47: #{tpu_custom_call.1} parent=1 // pred_check_branch
      %88 = sbr.rel (0) target = $region49
    $region48: #{tpu_custom_call.1} parent=1 // pred_region
      %90 = dma.done [#allocation6], 256
    $region49: #{tpu_custom_call.1} parent=1 // pred_fallthru
      _
    // Predicated region
    $region50: #{tpu_custom_call.1} parent=1 // pred_check
      _
    $region51: #{tpu_custom_call.1} parent=1 // pred_check_branch
      %92 = sbr.rel (0) target = $region53
    $region52: #{tpu_custom_call.1} parent=1 // pred_region
      %94 = dma.done [#allocation6], 1024
    $region53: #{tpu_custom_call.1} parent=1 // pred_fallthru
      _
    // Predicated region
    $region54: #{tpu_custom_call.1} parent=1 // pred_check
      _
    $region55: #{tpu_custom_call.1} parent=1 // pred_check_branch
      %96 = sbr.rel (0) target = $region57
    $region56: #{tpu_custom_call.1} parent=1 // pred_region
      %98 = dma.done [#allocation9], 1024
    $region57: #{tpu_custom_call.1} parent=1 // pred_fallthru
      _
    %v100 = vld [vmem:[#allocation2] sm:$0xf]
    %v101 = vld [vmem:[#allocation2 + $0x4] sm:$0xf]
    %v102 = vld [vmem:[#allocation5] sm:$0xf]
    %v103 = vld [vmem:[#allocation5 + $0x4] sm:$0xf]
    %v104 = vld [vmem:[#allocation5 + $0x8] sm:$0xf]
    %v105 = vld [vmem:[#allocation5 + $0xc] sm:$0xf]
    %v106 = vld [vmem:[%s2] sm:$0x1]
    %v107 = vld [vmem:[%s3] sm:$0x1]
    %v110 = vunpack.c.l.b16 %v100
    %v111 = vunpack.c.l.b16 %v101
    %v112 = vpack.c.b16 %v111, %v110
    %v117 = vunpack.c.l.b16 %v102
    %v118 = vunpack.c.l.b16 %v103
    %v119 = vunpack.c.l.b16 %v104
    %v120 = vunpack.c.l.b16 %v105
    %v121 = vpack.c.b16 %v118, %v117
    %v122 = vpack.c.b16 %v120, %v119
    %vm125 = vcmask 261120
    %v127 = vsel %vm125, %v112, 0
    %129 = vmatpush.bf16.msra.mxu0 0
    %130 = vmatpush.bf16.msra.mxu0 0
    %131 = vmatpush.bf16.msra.mxu0 0
    %132 = vmatpush.bf16.msra.mxu0 0
    %133 = vmatpush.bf16.msra.mxu0 0
    %134 = vmatpush.bf16.msra.mxu0 0
    %135 = vmatpush.bf16.msra.mxu0 %v122
    %136 = vmatpush.bf16.msra.mxu0 %v121
    %137 = vmatmul.bf16.gmra.mxu0 %v127
    %v138 = vpop.f32.mrf.mxu0
    %v139 = vadd.f32 0.0, %v138
    %v140 = vpop.f32.mrf.mxu0
    %v141 = vadd.f32 0.0, %v140
    %142 = vdwg.mxu0
    %v143 = vadd.f32 %v139, %v141
    %v144 = vrot.slane %v143, 4
    %v145 = vadd.f32 %v143, %v144
    %v146 = vrot.slane %v145, 2
    %v147 = vadd.f32 %v145, %v146
    %v148 = vrot.slane %v147, 1
    %v149 = vadd.f32 %v147, %v148
    %v150 = vrcp.pop 16.0
    %v151 = vmul.f32 16.0, %v150
    %v152 = vsub.f32 1.0, %v151
    %v153 = vmul.f32 %v150, %v152
    %v154 = vadd.f32 %v150, %v153
    %vm155 = vweird.f32 %v150
    %v156 = vsel %vm155, %v150, %v154
    %v157 = vmul.f32 %v149, %v156
    %v158 = vmul.f32 %v139, %v139
    %v159 = vmul.f32 %v141, %v141
    %v160 = vadd.f32 %v158, %v159
    %v161 = vrot.slane %v160, 4
    %v162 = vadd.f32 %v160, %v161
    %v163 = vrot.slane %v162, 2
    %v164 = vadd.f32 %v162, %v163
    %v165 = vrot.slane %v164, 1
    %v166 = vadd.f32 %v164, %v165
    %v167 = vmul.f32 %v166, %v156
    %v168 = vmul.f32 %v157, %v157
    %v169 = vsub.f32 %v167, %v168
    %v170 = vmax.f32 %v169, 0.0
    %v171 = vadd.f32 %v170, 1e-05
    %v172 = vrsqrt.pop %v171
    %v173 = vmul.f32 %v172, %v171
    %v174 = vmul.f32 %v173, %v172
    %v175 = vmul.f32 0.5, %v174
    %v176 = vsub.f32 1.5, %v175
    %v177 = vmul.f32 %v172, %v176
    %vm178 = vweird.f32 %v171
    %vm179 = vweird.f32 %v172
    %vm180 = vmor %vm178, %vm179
    %v181 = vsel %vm180, %v172, %v177
    %v182 = vmul.f32 %v106, %v181
    %v183 = vmul.f32 %v157, %v182
    %v184 = vsub.f32 %v107, %v183
    %v186 = vperm.slane %v182, 0
    %v188 = vmul.f32 %v139, %v186
    %v189 = vmul.f32 %v141, %v186
    %v191 = vperm.slane %v184, 0
    %v193 = vadd.f32 %v188, %v191
    %v194 = vadd.f32 %v189, %v191
    %v195 = vmax.f32 %v193, 0.0
    %v196 = vmax.f32 %v194, 0.0
    %v197 = vpack.c.bf16 %v196, %v195
    %v198 = vld [vmem:[#allocation7] sm:$0xf]
    %v199 = vld [vmem:[#allocation7 + $0x4] sm:$0xf]
    %v200 = vld [vmem:[#allocation7 + $0x8] sm:$0xf]
    %v201 = vld [vmem:[#allocation7 + $0xc] sm:$0xf]
    %v202 = vld [vmem:[#allocation7 + $0x10] sm:$0xf]
    %v203 = vld [vmem:[#allocation7 + $0x14] sm:$0xf]
    %v204 = vld [vmem:[#allocation7 + $0x18] sm:$0xf]
    %v205 = vld [vmem:[#allocation7 + $0x1c] sm:$0xf]
    %v206 = vld [vmem:[#allocation7 + $0x20] sm:$0xf]
    %v207 = vld [vmem:[#allocation7 + $0x24] sm:$0xf]
    %v208 = vld [vmem:[#allocation7 + $0x28] sm:$0xf]
    %v209 = vld [vmem:[#allocation7 + $0x2c] sm:$0xf]
    %v210 = vld [vmem:[#allocation7 + $0x30] sm:$0xf]
    %v211 = vld [vmem:[#allocation7 + $0x34] sm:$0xf]
    %v212 = vld [vmem:[#allocation7 + $0x38] sm:$0xf]
    %v213 = vld [vmem:[#allocation7 + $0x3c] sm:$0xf]
    %v214 = vld [vmem:[%s5] sm:$0x1]
    %v215 = vld [vmem:[%s6] sm:$0x1]
    %v232 = vunpack.c.l.b16 %v198
    %v233 = vunpack.c.l.b16 %v199
    %v234 = vunpack.c.l.b16 %v200
    %v235 = vunpack.c.l.b16 %v201
    %v236 = vunpack.c.l.b16 %v202
    %v237 = vunpack.c.l.b16 %v203
    %v238 = vunpack.c.l.b16 %v204
    %v239 = vunpack.c.l.b16 %v205
    %v240 = vunpack.c.l.b16 %v206
    %v241 = vunpack.c.l.b16 %v207
    %v242 = vunpack.c.l.b16 %v208
    %v243 = vunpack.c.l.b16 %v209
    %v244 = vunpack.c.l.b16 %v210
    %v245 = vunpack.c.l.b16 %v211
    %v246 = vunpack.c.l.b16 %v212
    %v247 = vunpack.c.l.b16 %v213
    %v248 = vpack.c.b16 %v233, %v232
    %v249 = vpack.c.b16 %v235, %v234
    %v250 = vpack.c.b16 %v237, %v236
    %v251 = vpack.c.b16 %v239, %v238
    %v252 = vpack.c.b16 %v241, %v240
    %v253 = vpack.c.b16 %v243, %v242
    %v254 = vpack.c.b16 %v245, %v244
    %v255 = vpack.c.b16 %v247, %v246
    %264 = vmatpush.bf16.msra.mxu0 %v255
    %265 = vmatpush.bf16.msra.mxu0 %v254
    %266 = vmatpush.bf16.msra.mxu0 %v253
    %267 = vmatpush.bf16.msra.mxu0 %v252
    %268 = vmatpush.bf16.msra.mxu0 %v251
    %269 = vmatpush.bf16.msra.mxu0 %v250
    %270 = vmatpush.bf16.msra.mxu0 %v249
    %271 = vmatpush.bf16.msra.mxu0 %v248
    %272 = vmatmul.bf16.gmra.mxu0 %v197
    %v273 = vpop.f32.mrf.mxu0
    %v274 = vadd.f32 0.0, %v273
    %v275 = vpop.f32.mrf.mxu0
    %v276 = vadd.f32 0.0, %v275
    %277 = vdwg.mxu0
    %v278 = vadd.f32 %v274, %v276
    %v279 = vrot.slane %v278, 4
    %v280 = vadd.f32 %v278, %v279
    %v281 = vrot.slane %v280, 2
    %v282 = vadd.f32 %v280, %v281
    %v283 = vrot.slane %v282, 1
    %v284 = vadd.f32 %v282, %v283
    %v285 = vmul.f32 %v284, %v156
    %v286 = vmul.f32 %v274, %v274
    %v287 = vmul.f32 %v276, %v276
    %v288 = vadd.f32 %v286, %v287
    %v289 = vrot.slane %v288, 4
    %v290 = vadd.f32 %v288, %v289
    %v291 = vrot.slane %v290, 2
    %v292 = vadd.f32 %v290, %v291
    %v293 = vrot.slane %v292, 1
    %v294 = vadd.f32 %v292, %v293
    %v295 = vmul.f32 %v294, %v156
    %v296 = vmul.f32 %v285, %v285
    %v297 = vsub.f32 %v295, %v296
    %v298 = vmax.f32 %v297, 0.0
    %v299 = vadd.f32 %v298, 1e-05
    %v300 = vrsqrt.pop %v299
    %v301 = vmul.f32 %v300, %v299
    %v302 = vmul.f32 %v301, %v300
    %v303 = vmul.f32 0.5, %v302
    %v304 = vsub.f32 1.5, %v303
    %v305 = vmul.f32 %v300, %v304
    %vm306 = vweird.f32 %v299
    %vm307 = vweird.f32 %v300
    %vm308 = vmor %vm306, %vm307
    %v309 = vsel %vm308, %v300, %v305
    %v310 = vmul.f32 %v214, %v309
    %v311 = vmul.f32 %v285, %v310
    %v312 = vsub.f32 %v215, %v311
    %v314 = vperm.slane %v310, 0
    %v316 = vmul.f32 %v274, %v314
    %v317 = vmul.f32 %v276, %v314
    %v319 = vperm.slane %v312, 0
    %v321 = vadd.f32 %v316, %v319
    %v322 = vadd.f32 %v317, %v319
    %v323 = vmax.f32 %v321, 0.0
    %v324 = vmax.f32 %v322, 0.0
    %v325 = vpack.c.bf16 %v324, %v323
    %v326 = vld [vmem:[#allocation8] sm:$0xf]
    %v327 = vld [vmem:[#allocation8 + $0x4] sm:$0xf]
    %v328 = vld [vmem:[#allocation8 + $0x8] sm:$0xf]
    %v329 = vld [vmem:[#allocation8 + $0xc] sm:$0xf]
    %v330 = vld [vmem:[#allocation8 + $0x10] sm:$0xf]
    %v331 = vld [vmem:[#allocation8 + $0x14] sm:$0xf]
    %v332 = vld [vmem:[#allocation8 + $0x18] sm:$0xf]
    %v333 = vld [vmem:[#allocation8 + $0x1c] sm:$0xf]
    %v334 = vld [vmem:[#allocation8 + $0x20] sm:$0xf]
    %v335 = vld [vmem:[#allocation8 + $0x24] sm:$0xf]
    %v336 = vld [vmem:[#allocation8 + $0x28] sm:$0xf]
    %v337 = vld [vmem:[#allocation8 + $0x2c] sm:$0xf]
    %v338 = vld [vmem:[#allocation8 + $0x30] sm:$0xf]
    %v339 = vld [vmem:[#allocation8 + $0x34] sm:$0xf]
    %v340 = vld [vmem:[#allocation8 + $0x38] sm:$0xf]
    %v341 = vld [vmem:[#allocation8 + $0x3c] sm:$0xf]
    %v342 = vld [vmem:[%s8] sm:$0x1]
    %v343 = vld [vmem:[%s9] sm:$0x1]
    %v360 = vunpack.c.l.b16 %v326
    %v361 = vunpack.c.l.b16 %v327
    %v362 = vunpack.c.l.b16 %v328
    %v363 = vunpack.c.l.b16 %v329
    %v364 = vunpack.c.l.b16 %v330
    %v365 = vunpack.c.l.b16 %v331
    %v366 = vunpack.c.l.b16 %v332
    %v367 = vunpack.c.l.b16 %v333
    %v368 = vunpack.c.l.b16 %v334
    %v369 = vunpack.c.l.b16 %v335
    %v370 = vunpack.c.l.b16 %v336
    %v371 = vunpack.c.l.b16 %v337
    %v372 = vunpack.c.l.b16 %v338
    %v373 = vunpack.c.l.b16 %v339
    %v374 = vunpack.c.l.b16 %v340
    %v375 = vunpack.c.l.b16 %v341
    %v376 = vpack.c.b16 %v361, %v360
    %v377 = vpack.c.b16 %v363, %v362
    %v378 = vpack.c.b16 %v365, %v364
    %v379 = vpack.c.b16 %v367, %v366
    %v380 = vpack.c.b16 %v369, %v368
    %v381 = vpack.c.b16 %v371, %v370
    %v382 = vpack.c.b16 %v373, %v372
    %v383 = vpack.c.b16 %v375, %v374
    %392 = vmatpush.bf16.msra.mxu0 %v383
    %393 = vmatpush.bf16.msra.mxu0 %v382
    %394 = vmatpush.bf16.msra.mxu0 %v381
    %395 = vmatpush.bf16.msra.mxu0 %v380
    %396 = vmatpush.bf16.msra.mxu0 %v379
    %397 = vmatpush.bf16.msra.mxu0 %v378
    %398 = vmatpush.bf16.msra.mxu0 %v377
    %399 = vmatpush.bf16.msra.mxu0 %v376
    %400 = vmatmul.bf16.gmra.mxu0 %v325
    %v401 = vpop.f32.mrf.mxu0
    %v402 = vadd.f32 0.0, %v401
    %v403 = vpop.f32.mrf.mxu0
    %v404 = vadd.f32 0.0, %v403
    %405 = vdwg.mxu0
    %v406 = vadd.f32 %v402, %v404
    %v407 = vrot.slane %v406, 4
    %v408 = vadd.f32 %v406, %v407
    %v409 = vrot.slane %v408, 2
    %v410 = vadd.f32 %v408, %v409
    %v411 = vrot.slane %v410, 1
    %v412 = vadd.f32 %v410, %v411
    %v413 = vmul.f32 %v412, %v156
    %v414 = vmul.f32 %v402, %v402
    %v415 = vmul.f32 %v404, %v404
    %v416 = vadd.f32 %v414, %v415
    %v417 = vrot.slane %v416, 4
    %v418 = vadd.f32 %v416, %v417
    %v419 = vrot.slane %v418, 2
    %v420 = vadd.f32 %v418, %v419
    %v421 = vrot.slane %v420, 1
    %v422 = vadd.f32 %v420, %v421
    %v423 = vmul.f32 %v422, %v156
    %v424 = vmul.f32 %v413, %v413
    %v425 = vsub.f32 %v423, %v424
    %v426 = vmax.f32 %v425, 0.0
    %v427 = vadd.f32 %v426, 1e-05
    %v428 = vrsqrt.pop %v427
    %v429 = vmul.f32 %v428, %v427
    %v430 = vmul.f32 %v429, %v428
    %v431 = vmul.f32 0.5, %v430
    %v432 = vsub.f32 1.5, %v431
    %v433 = vmul.f32 %v428, %v432
    %vm434 = vweird.f32 %v427
    %vm435 = vweird.f32 %v428
    %vm436 = vmor %vm434, %vm435
    %v437 = vsel %vm436, %v428, %v433
    %v438 = vmul.f32 %v342, %v437
    %v439 = vmul.f32 %v413, %v438
    %v440 = vsub.f32 %v343, %v439
    %v442 = vperm.slane %v438, 0
    %v444 = vmul.f32 %v402, %v442
    %v445 = vmul.f32 %v404, %v442
    %v447 = vperm.slane %v440, 0
    %v449 = vadd.f32 %v444, %v447
    %v450 = vadd.f32 %v445, %v447
    %v451 = vsub.f32 0.0, %v449
    %v452 = vsub.f32 0.0, %v450
    %v453 = vmul.f32 %v451, 1.442695
    %v454 = vpow.pop %v453
    %v455 = vmul.f32 %v452, 1.442695
    %v456 = vpow.pop %v455
    %v457 = vadd.f32 %v454, 1.0
    %v458 = vadd.f32 %v456, 1.0
    %v459 = vrcp.pop %v457
    %v460 = vmul.f32 %v457, %v459
    %v461 = vsub.f32 1.0, %v460
    %v462 = vmul.f32 %v459, %v461
    %v463 = vadd.f32 %v459, %v462
    %vm464 = vweird.f32 %v457
    %vm465 = vweird.f32 %v459
    %vm466 = vmor %vm464, %vm465
    %v467 = vsel %vm466, %v459, %v463
    %v468 = vand.u32 2147483647, %v457
    %vm469 = vcmp.eq.f32.partialorder %v468, 8.507059e+37
    %v470 = vand.u32 %v457, 2147483648
    %v471 = vor.u32 1.1754944e-38, %v470
    %v472 = vsel %vm469, %v471, %v467
    %v473 = vmul.f32 1.0, %v472
    %v474 = vrcp.pop %v458
    %v475 = vmul.f32 %v458, %v474
    %v476 = vsub.f32 1.0, %v475
    %v477 = vmul.f32 %v474, %v476
    %v478 = vadd.f32 %v474, %v477
    %vm479 = vweird.f32 %v458
    %vm480 = vweird.f32 %v474
    %vm481 = vmor %vm479, %vm480
    %v482 = vsel %vm481, %v474, %v478
    %v483 = vand.u32 2147483647, %v458
    %vm484 = vcmp.eq.f32.partialorder %v483, 8.507059e+37
    %v485 = vand.u32 %v458, 2147483648
    %v486 = vor.u32 1.1754944e-38, %v485
    %v487 = vsel %vm484, %v486, %v482
    %v488 = vmul.f32 1.0, %v487
    %489 = vst [vmem:[#allocation10] sm:$0xff] %v473
    %490 = vst [vmem:[#allocation10 + $0x8] sm:$0xff] %v488
    // Predicated region
    $region58: #{tpu_custom_call.1} parent=1 // pred_check
      _
    $region59: #{tpu_custom_call.1} parent=1 // pred_check_branch
      %492 = sbr.rel (0) target = $region61
    $region60: #{tpu_custom_call.1} parent=1 // pred_region
      %494 = vsyncadd [#allocation4], 0
      %s495 = sshll.u32 [#allocation10], 4
      %s496 = int_to_ptr.vmem [resolvable:$true] %s495
      %s497 = sshll.u32 %s10, 4
      %s498 = int_to_ptr.hbm [resolvable:$true] %s497
      %503 = dma.vmem_to_hbm [thread:$0]  %s496, 256, %s498, [#allocation4], 128, 128, 8
    $region61: #{tpu_custom_call.1} parent=1 // pred_fallthru
      _
    // Predicated region
    $region62: #{tpu_custom_call.1} parent=1 // pred_check
      _
    $region63: #{tpu_custom_call.1} parent=1 // pred_check_branch
      %505 = sbr.rel (0) target = $region65
    $region64: #{tpu_custom_call.1} parent=1 // pred_region
      %507 = dma.done [#allocation4], 256
    $region65: #{tpu_custom_call.1} parent=1 // pred_fallthru
      _
    %508 = vsyncpa [#allocation3], 1
    %509 = vsyncpa [#allocation6], 1
    %510 = vsyncpa [#allocation9], 1
    %511 = vsyncpa [#allocation4], 1

</llo_original>
